<compile_context>
chip_gen: v5e
topology: v5e:2x2
jax: 0.10.0
libtpu: 0.0.40
codegen_flags: <defaults>
</compile_context>

<pallas_src>
import math

import jax
import jax.numpy as jnp
from jax import lax
from jax.experimental import pallas as pl
from jax.experimental.pallas import tpu as pltpu


def _cross_attn_kernel(x_ref, y_ref, z_ref, wq_ref, wk_ref, wv_ref,
                       out_ref, attn_ref):
    bblk, n, d = x_ref.shape
    e = wq_ref.shape[0]

    # Fold the batch block into the matmul M dimension for the projections.
    x = x_ref[...].reshape(bblk * n, d)
    y = y_ref[...].reshape(bblk * n, d)
    z = z_ref[...].reshape(bblk * n, d)

    # nn.Linear (bias=False): x @ W^T, with W stored as (inner_dim, in_dim).
    # Contract the last dims of both operands -> no transpose materialized.
    dn_lin = (((1,), (1,)), ((), ()))
    q = lax.dot_general(x, wq_ref[...], dn_lin,
                        preferred_element_type=jnp.float32)
    k = lax.dot_general(y, wk_ref[...], dn_lin,
                        preferred_element_type=jnp.float32)
    v = lax.dot_general(z, wv_ref[...], dn_lin,
                        preferred_element_type=jnp.float32)

    # scale_dot: q / sqrt(E) with E = inner_dim.
    q = q * (1.0 / math.sqrt(e))

    q = q.reshape(bblk, n, e)
    k = k.reshape(bblk, n, e)
    v = v.reshape(bblk, n, e)

    # Batched scores s[b] = q[b] @ k[b]^T without an explicit transpose.
    s = lax.dot_general(q, k, (((2,), (2,)), ((0,), (0,))),
                        preferred_element_type=jnp.float32)  # (bblk, n, n)

    # Numerically stable softmax over the last dim (all in f32).
    s_max = jnp.max(s, axis=-1, keepdims=True)
    p = jnp.exp(s - s_max)
    denom = jnp.sum(p, axis=-1, keepdims=True)
    inv = pl.reciprocal(denom, approx=True)       # EUP vrcp (free slot)
    inv = inv * (2.0 - denom * inv)               # one Newton step -> <1e-7 rel err
    attn = p * inv

    # Attention output: attn[b] @ v[b].
    out = lax.dot_general(attn, v, (((2,), (1,)), ((0,), (0,))),
                          preferred_element_type=jnp.float32)  # (bblk, n, e)

    out_ref[...] = out.astype(out_ref.dtype)
    attn_ref[...] = attn.astype(attn_ref.dtype)


def _pick_bblk(B, N, D, E):
    """Largest divisor of B that keeps the per-step working set comfortably
    inside VMEM, preferring bblk*N >= 256 rows to fill the MXU M dimension."""
    budget = 24 * 1024 * 1024  # conservative; fits v7x's smaller VMEM too
    best = 1
    for cand in range(1, B + 1):
        if B % cand:
            continue
        io_blocks = cand * (3 * N * D + N * E + N * N) * 4 * 2  # double-buffered
        interm = cand * (3 * N * E + 2 * N * N) * 4             # q/k/v + scores
        if io_blocks + interm > budget:
            break
        best = cand
        if cand * N >= 256:
            break
    return best


def cross_attention(x, y, z, wq, wk, wv, *, bblk=None):
    """
    x, y, z: (B, N, D) float32
    wq, wk, wv: (inner_dim, in_dim)  -- PyTorch nn.Linear weight layout
    Returns: (out: (B, N, inner_dim), attn: (B, N, N))
    """
    B, N, D = x.shape
    E = wq.shape[0]

    if bblk is None:
        bblk = _pick_bblk(B, N, D, E)
    assert B % bblk == 0, "batch block must divide B"

    tok_spec = pl.BlockSpec((bblk, N, D), lambda b: (b, 0, 0))
    w_spec = pl.BlockSpec((E, D), lambda b: (0, 0))

    out_shape = (
        jax.ShapeDtypeStruct((B, N, E), x.dtype),
        jax.ShapeDtypeStruct((B, N, N), x.dtype),
    )

    cost = pl.CostEstimate(
        flops=2 * B * N * E * (3 * D + 2 * N),
        transcendentals=B * N * N,
        bytes_accessed=4 * (3 * B * N * D + 3 * E * D + B * N * E + B * N * N),
    )

    # TODO(synk): dropout in scale_dot / to_out is a no-op here (dropout_p=0.0,
    # prj_out=False); add a PRNG-based mask if those configs are ever enabled.
    return pl.pallas_call(
        _cross_attn_kernel,
        out_shape=out_shape,
        grid_spec=pltpu.PrefetchScalarGridSpec(
            num_scalar_prefetch=0,
            grid=(B // bblk,),
            in_specs=[tok_spec, tok_spec, tok_spec, w_spec, w_spec, w_spec],
            out_specs=[
                pl.BlockSpec((bblk, N, E), lambda b: (b, 0, 0)),
                pl.BlockSpec((bblk, N, N), lambda b: (b, 0, 0)),
            ],
        ),
        compiler_params=pltpu.CompilerParams(
            dimension_semantics=("parallel",)),
        cost_estimate=cost,
    )(x, y, z, wq, wk, wv)


def _reference(x, y, z, wq, wk, wv):
    q = jnp.einsum("bnd,ed->bne", x, wq)
    k = jnp.einsum("bnd,ed->bne", y, wk)
    v = jnp.einsum("bnd,ed->bne", z, wv)
    E = q.shape[-1]
    q = q / math.sqrt(E)
    s = jnp.einsum("bne,bme->bnm", q, k)
    attn = jax.nn.softmax(s, axis=-1)
    out = jnp.einsum("bnm,bme->bne", attn, v)
    return out, attn


if __name__ == "__main__":
    B, N, D = 2, 8, 32  # batch, seq, in_dim (inner_dim == in_dim by default)

    key = jax.random.PRNGKey(0)
    kx, ky, kz, kq, kk, kv = jax.random.split(key, 6)

    x = jax.random.normal(kx, (B, N, D), dtype=jnp.float32)
    y = jax.random.normal(ky, (B, N, D), dtype=jnp.float32)
    z = jax.random.normal(kz, (B, N, D), dtype=jnp.float32)

    # nn.Linear default init range; deterministic uniform here.
    bound = 1.0 / math.sqrt(D)
    wq = jax.random.uniform(kq, (D, D), minval=-bound, maxval=bound,
                            dtype=jnp.float32)
    wk = jax.random.uniform(kk, (D, D), minval=-bound, maxval=bound,
                            dtype=jnp.float32)
    wv = jax.random.uniform(kv, (D, D), minval=-bound, maxval=bound,
                            dtype=jnp.float32)

    out, attn = cross_attention(x, y, z, wq, wk, wv)
    out = jax.block_until_ready(out)
    attn = jax.block_until_ready(attn)

    out_ref, attn_ref = _reference(x, y, z, wq, wk, wv)
    assert jnp.allclose(out, out_ref, atol=1e-5, rtol=1e-5)
    assert jnp.allclose(attn, attn_ref, atol=1e-5, rtol=1e-5)
    assert out.shape == (B, N, D) and attn.shape == (B, N, N)

    print("KERNEL_OK")
</pallas_src>

<mosaic_0001>
module attributes {stable_mosaic.version = 11 : i64} {
  func.func @_cross_attn_kernel(%arg0: i32, %arg1: memref<2x8x32xf32, #tpu.memory_space<vmem>>, %arg2: memref<2x8x32xf32, #tpu.memory_space<vmem>>, %arg3: memref<2x8x32xf32, #tpu.memory_space<vmem>>, %arg4: memref<32x32xf32, #tpu.memory_space<vmem>>, %arg5: memref<32x32xf32, #tpu.memory_space<vmem>>, %arg6: memref<32x32xf32, #tpu.memory_space<vmem>>, %arg7: memref<2x8x32xf32, #tpu.memory_space<vmem>>, %arg8: memref<2x8x8xf32, #tpu.memory_space<vmem>>) attributes {dimension_semantics = [#tpu.dimension_semantics<parallel>], iteration_bounds = array<i64: 1>, scalar_prefetch = 0 : i64, scratch_operands = 0 : i64, tpu.core_type = #tpu.core_type<tc>, window_params = [{transform_indices = @transform_0, window_bounds = array<i64: 2, 8, 32>}, {transform_indices = @transform_1, window_bounds = array<i64: 2, 8, 32>}, {transform_indices = @transform_2, window_bounds = array<i64: 2, 8, 32>}, {pipeline_mode = #tpu.pipeline_mode<synchronous>, transform_indices = @transform_3, window_bounds = array<i64: 32, 32>}, {pipeline_mode = #tpu.pipeline_mode<synchronous>, transform_indices = @transform_4, window_bounds = array<i64: 32, 32>}, {pipeline_mode = #tpu.pipeline_mode<synchronous>, transform_indices = @transform_5, window_bounds = array<i64: 32, 32>}, {transform_indices = @transform_6, window_bounds = array<i64: 2, 8, 32>}, {transform_indices = @transform_7, window_bounds = array<i64: 2, 8, 8>}]} {
    %c0 = arith.constant 0 : index
    %c0_0 = arith.constant 0 : index
    %c0_1 = arith.constant 0 : index
    %0 = vector.load %arg1[%c0, %c0_0, %c0_1] : memref<2x8x32xf32, #tpu.memory_space<vmem>>, vector<2x8x32xf32>
    %1 = vector.shape_cast %0 : vector<2x8x32xf32> to vector<16x32xf32>
    %c0_2 = arith.constant 0 : index
    %c0_3 = arith.constant 0 : index
    %c0_4 = arith.constant 0 : index
    %2 = vector.load %arg2[%c0_2, %c0_3, %c0_4] : memref<2x8x32xf32, #tpu.memory_space<vmem>>, vector<2x8x32xf32>
    %3 = vector.shape_cast %2 : vector<2x8x32xf32> to vector<16x32xf32>
    %c0_5 = arith.constant 0 : index
    %c0_6 = arith.constant 0 : index
    %c0_7 = arith.constant 0 : index
    %4 = vector.load %arg3[%c0_5, %c0_6, %c0_7] : memref<2x8x32xf32, #tpu.memory_space<vmem>>, vector<2x8x32xf32>
    %5 = vector.shape_cast %4 : vector<2x8x32xf32> to vector<16x32xf32>
    %c0_8 = arith.constant 0 : index
    %c0_9 = arith.constant 0 : index
    %6 = vector.load %arg4[%c0_8, %c0_9] : memref<32x32xf32, #tpu.memory_space<vmem>>, vector<32x32xf32>
    %cst = arith.constant dense<0.000000e+00> : vector<16x32xf32>
    %7 = tpu.matmul %1, %6, %cst {dimension_numbers = #tpu.dot_dimension_numbers<[1], [1], [0], [0], [0, 0, 1, 0], [], []>} : vector<16x32xf32>, vector<32x32xf32>, vector<16x32xf32> -> vector<16x32xf32>
    %c0_10 = arith.constant 0 : index
    %c0_11 = arith.constant 0 : index
    %8 = vector.load %arg5[%c0_10, %c0_11] : memref<32x32xf32, #tpu.memory_space<vmem>>, vector<32x32xf32>
    %cst_12 = arith.constant dense<0.000000e+00> : vector<16x32xf32>
    %9 = tpu.matmul %3, %8, %cst_12 {dimension_numbers = #tpu.dot_dimension_numbers<[1], [1], [0], [0], [0, 0, 1, 0], [], []>} : vector<16x32xf32>, vector<32x32xf32>, vector<16x32xf32> -> vector<16x32xf32>
    %c0_13 = arith.constant 0 : index
    %c0_14 = arith.constant 0 : index
    %10 = vector.load %arg6[%c0_13, %c0_14] : memref<32x32xf32, #tpu.memory_space<vmem>>, vector<32x32xf32>
    %cst_15 = arith.constant dense<0.000000e+00> : vector<16x32xf32>
    %11 = tpu.matmul %5, %10, %cst_15 {dimension_numbers = #tpu.dot_dimension_numbers<[1], [1], [0], [0], [0, 0, 1, 0], [], []>} : vector<16x32xf32>, vector<32x32xf32>, vector<16x32xf32> -> vector<16x32xf32>
    %cst_16 = arith.constant 0.176776692 : f32
    %12 = vector.broadcast %cst_16 : f32 to vector<16x32xf32>
    %13 = arith.mulf %7, %12 : vector<16x32xf32>
    %14 = vector.shape_cast %13 : vector<16x32xf32> to vector<2x8x32xf32>
    %15 = vector.shape_cast %9 : vector<16x32xf32> to vector<2x8x32xf32>
    %16 = vector.shape_cast %11 : vector<16x32xf32> to vector<2x8x32xf32>
    %cst_17 = arith.constant dense<0.000000e+00> : vector<2x8x8xf32>
    %17 = tpu.matmul %14, %15, %cst_17 {dimension_numbers = #tpu.dot_dimension_numbers<[2], [2], [1], [1], [0, 0, 0, 1, 1, 1], [0], [0]>} : vector<2x8x32xf32>, vector<2x8x32xf32>, vector<2x8x8xf32> -> vector<2x8x8xf32>
    %cst_18 = arith.constant dense<0xFF800000> : vector<2x8xf32>
    %18 = vector.multi_reduction <maximumf>, %17, %cst_18 [2] : vector<2x8x8xf32> to vector<2x8xf32>
    %19 = vector.shape_cast %18 : vector<2x8xf32> to vector<2x8x1xf32>
    %20 = vector.broadcast %19 : vector<2x8x1xf32> to vector<2x8x8xf32>
    %21 = arith.subf %17, %20 : vector<2x8x8xf32>
    %22 = math.exp %21 : vector<2x8x8xf32>
    %cst_19 = arith.constant dense<0.000000e+00> : vector<2x8xf32>
    %23 = vector.multi_reduction <add>, %22, %cst_19 [2] : vector<2x8x8xf32> to vector<2x8xf32>
    %24 = vector.shape_cast %23 : vector<2x8xf32> to vector<2x8x1xf32>
    %25 = tpu.reciprocal %24 {approx = true} : vector<2x8x1xf32> -> vector<2x8x1xf32>
    %26 = arith.mulf %24, %25 : vector<2x8x1xf32>
    %cst_20 = arith.constant 2.000000e+00 : f32
    %27 = vector.broadcast %cst_20 : f32 to vector<2x8x1xf32>
    %28 = arith.subf %27, %26 : vector<2x8x1xf32>
    %29 = arith.mulf %25, %28 : vector<2x8x1xf32>
    %30 = vector.broadcast %29 : vector<2x8x1xf32> to vector<2x8x8xf32>
    %31 = arith.mulf %22, %30 : vector<2x8x8xf32>
    %cst_21 = arith.constant dense<0.000000e+00> : vector<2x8x32xf32>
    %32 = tpu.matmul %31, %16, %cst_21 {dimension_numbers = #tpu.dot_dimension_numbers<[2], [1], [1], [2], [0, 0, 0, 1, 1, 2], [0], [0]>} : vector<2x8x8xf32>, vector<2x8x32xf32>, vector<2x8x32xf32> -> vector<2x8x32xf32>
    %c0_22 = arith.constant 0 : index
    %c0_23 = arith.constant 0 : index
    %c0_24 = arith.constant 0 : index
    %33 = vector.load %arg7[%c0_22, %c0_23, %c0_24] : memref<2x8x32xf32, #tpu.memory_space<vmem>>, vector<2x8x32xf32>
    tpu.vector_store %arg7[%c0_22, %c0_23, %c0_24], %32 {strides = array<i32>} : memref<2x8x32xf32, #tpu.memory_space<vmem>>, vector<2x8x32xf32>,
    %c0_25 = arith.constant 0 : index
    %c0_26 = arith.constant 0 : index
    %c0_27 = arith.constant 0 : index
    %34 = vector.load %arg8[%c0_25, %c0_26, %c0_27] : memref<2x8x8xf32, #tpu.memory_space<vmem>>, vector<2x8x8xf32>
    tpu.vector_store %arg8[%c0_25, %c0_26, %c0_27], %31 {strides = array<i32>} : memref<2x8x8xf32, #tpu.memory_space<vmem>>, vector<2x8x8xf32>,
    return
  }
  func.func @transform_0(%arg0: i32) -> (i32, i32, i32) {
    %c0_i32 = arith.constant 0 : i32
    %c0_i32_0 = arith.constant 0 : i32
    %c0_i32_1 = arith.constant 0 : i32
    return %arg0, %c0_i32, %c0_i32_0 : i32, i32, i32
  }
  func.func @transform_1(%arg0: i32) -> (i32, i32, i32) {
    %c0_i32 = arith.constant 0 : i32
    %c0_i32_0 = arith.constant 0 : i32
    %c0_i32_1 = arith.constant 0 : i32
    return %arg0, %c0_i32, %c0_i32_0 : i32, i32, i32
  }
  func.func @transform_2(%arg0: i32) -> (i32, i32, i32) {
    %c0_i32 = arith.constant 0 : i32
    %c0_i32_0 = arith.constant 0 : i32
    %c0_i32_1 = arith.constant 0 : i32
    return %arg0, %c0_i32, %c0_i32_0 : i32, i32, i32
  }
  func.func @transform_3(%arg0: i32) -> (i32, i32) {
    %c0_i32 = arith.constant 0 : i32
    %c0_i32_0 = arith.constant 0 : i32
    %c0_i32_1 = arith.constant 0 : i32
    return %c0_i32, %c0_i32_0 : i32, i32
  }
  func.func @transform_4(%arg0: i32) -> (i32, i32) {
    %c0_i32 = arith.constant 0 : i32
    %c0_i32_0 = arith.constant 0 : i32
    %c0_i32_1 = arith.constant 0 : i32
    return %c0_i32, %c0_i32_0 : i32, i32
  }
  func.func @transform_5(%arg0: i32) -> (i32, i32) {
    %c0_i32 = arith.constant 0 : i32
    %c0_i32_0 = arith.constant 0 : i32
    %c0_i32_1 = arith.constant 0 : i32
    return %c0_i32, %c0_i32_0 : i32, i32
  }
  func.func @transform_6(%arg0: i32) -> (i32, i32, i32) {
    %c0_i32 = arith.constant 0 : i32
    %c0_i32_0 = arith.constant 0 : i32
    %c0_i32_1 = arith.constant 0 : i32
    return %arg0, %c0_i32, %c0_i32_0 : i32, i32, i32
  }
  func.func @transform_7(%arg0: i32) -> (i32, i32, i32) {
    %c0_i32 = arith.constant 0 : i32
    %c0_i32_0 = arith.constant 0 : i32
    %c0_i32_1 = arith.constant 0 : i32
    return %arg0, %c0_i32, %c0_i32_0 : i32, i32, i32
  }
}

</mosaic_0001>

<llo_original>
// kernel: tpu_custom_call.1
$region0: #{tpu_custom_call.1}
  #allocation0 [shape = 'u32[]', space=smem, size = 0x4, offset = 0x4, fixed_abs, tag = 'smem constant byte address 0x4 - core index']
  #allocation1 [shape = 'u32[72,128]{1,0:T(1,128)}', space=vmem, size = 0x9000, scoped, tag = 'internal scratch']
  %s0 = inlined_call_operand.hbm [shape: f32[2,8,32], index: 0, kind: input, shape index: {}]
  %s1 = inlined_call_operand.hbm [shape: f32[2,8,32], index: 1, kind: input, shape index: {}]
  %s2 = inlined_call_operand.hbm [shape: f32[2,8,32], index: 2, kind: input, shape index: {}]
  %s3 = inlined_call_operand.hbm [shape: f32[32,32], index: 3, kind: input, shape index: {}]
  %s4 = inlined_call_operand.hbm [shape: f32[32,32], index: 4, kind: input, shape index: {}]
  %s5 = inlined_call_operand.hbm [shape: f32[32,32], index: 5, kind: input, shape index: {}]
  %s6 = inlined_call_operand.hbm [shape: f32[2,8,32], index: 6, kind: output, shape index: {0}]
  %s7 = inlined_call_operand.hbm [shape: f32[2,8,8], index: 7, kind: output, shape index: {1}]
  %8 = xla_tuple %s6, %s7
  %s9 = sld [smem:[#allocation0]]
  $region66: #{tpu_custom_call.1} parent=0
    _
  %s11 = ssub.s32 1, %s9
  %s12 = scalar_select 0, %s11, %s9
  $region1: #{tpu_custom_call.1} parent=0
    #allocation2 [shape = 'u8[8192]{0}', space=vmem, size = 0x2000, scoped, tag = 'input window, operand 0, single buffered']
    #allocation3 [shape = 's32[1]{0}', space=sflag, size = 0x4, scoped, tag = 'scoped memory for tpu_custom_call.1']
    #allocation4 [shape = 's32[1]{0}', space=sflag, size = 0x4, scoped, tag = 'scoped memory for tpu_custom_call.1']
    #allocation5 [shape = 'u8[8192]{0}', space=vmem, size = 0x2000, scoped, tag = 'input window, operand 1, single buffered']
    #allocation6 [shape = 's32[1]{0}', space=sflag, size = 0x4, scoped, tag = 'scoped memory for tpu_custom_call.1']
    #allocation7 [shape = 'u8[8192]{0}', space=vmem, size = 0x2000, scoped, tag = 'input window, operand 2, single buffered']
    #allocation8 [shape = 'u8[16384]{0}', space=vmem, size = 0x4000, scoped, tag = 'input window, operand 3, single buffered']
    #allocation9 [shape = 's32[1]{0}', space=sflag, size = 0x4, scoped, tag = 'scoped memory for tpu_custom_call.1']
    #allocation10 [shape = 'u8[16384]{0}', space=vmem, size = 0x4000, scoped, tag = 'input window, operand 4, single buffered']
    #allocation11 [shape = 'u8[16384]{0}', space=vmem, size = 0x4000, scoped, tag = 'input window, operand 5, single buffered']
    #allocation12 [shape = 's32[1]{0}', space=sflag, size = 0x4, scoped, tag = 'scoped memory for tpu_custom_call.1']
    #allocation13 [shape = 'u8[8192]{0}', space=vmem, size = 0x2000, scoped, tag = 'output window, operand 0, single buffered']
    #allocation14 [shape = 'u8[8192]{0}', space=vmem, size = 0x2000, scoped, tag = 'output window, operand 1, single buffered']
    #allocation15 [shape = 's32[1]{0}', space=sflag, size = 0x4, scoped, tag = 'scoped memory for tpu_custom_call.1']
    %13 = vsyncpa [#allocation3], 0
    %14 = vsyncpa [#allocation6], 0
    %15 = vsyncpa [#allocation9], 0
    %16 = vsyncpa [#allocation12], 0
    %17 = vsyncpa [#allocation4], 0
    %18 = vsyncpa [#allocation15], 0
    // Predicated region
    $region2: #{tpu_custom_call.1} parent=1 // pred_check
      _
    $region3: #{tpu_custom_call.1} parent=1 // pred_check_branch
      %20 = sbr.rel (0) target = $region5
    $region4: #{tpu_custom_call.1} parent=1 // pred_region
      %22 = vsyncadd [#allocation3], 0
      %s23 = sshll.u32 %s0, 4
      %s24 = int_to_ptr.hbm [resolvable:$true] %s23
      %s25 = sshll.u32 [#allocation2], 4
      %s26 = int_to_ptr.vmem [resolvable:$true] %s25
      %31 = dma.hbm_to_vmem [thread:$0]  %s24, 256, %s26, [#allocation3], 128, 128, 8
    $region5: #{tpu_custom_call.1} parent=1 // pred_fallthru
      _
    // Predicated region
    $region6: #{tpu_custom_call.1} parent=1 // pred_check
      _
    $region7: #{tpu_custom_call.1} parent=1 // pred_check_branch
      %33 = sbr.rel (0) target = $region9
    $region8: #{tpu_custom_call.1} parent=1 // pred_region
      %35 = vsyncadd [#allocation6], 0
      %s36 = sshll.u32 %s1, 4
      %s37 = int_to_ptr.hbm [resolvable:$true] %s36
      %s38 = sshll.u32 [#allocation5], 4
      %s39 = int_to_ptr.vmem [resolvable:$true] %s38
      %44 = dma.hbm_to_vmem [thread:$0]  %s37, 256, %s39, [#allocation6], 128, 128, 8
    $region9: #{tpu_custom_call.1} parent=1 // pred_fallthru
      _
    // Predicated region
    $region10: #{tpu_custom_call.1} parent=1 // pred_check
      _
    $region11: #{tpu_custom_call.1} parent=1 // pred_check_branch
      %46 = sbr.rel (0) target = $region13
    $region12: #{tpu_custom_call.1} parent=1 // pred_region
      %48 = vsyncadd [#allocation6], 0
      %s49 = sshll.u32 %s2, 4
      %s50 = int_to_ptr.hbm [resolvable:$true] %s49
      %s51 = sshll.u32 [#allocation7], 4
      %s52 = int_to_ptr.vmem [resolvable:$true] %s51
      %57 = dma.hbm_to_vmem [thread:$0]  %s50, 256, %s52, [#allocation6], 128, 128, 8
    $region13: #{tpu_custom_call.1} parent=1 // pred_fallthru
      _
    // Predicated region
    $region14: #{tpu_custom_call.1} parent=1 // pred_check
      _
    $region15: #{tpu_custom_call.1} parent=1 // pred_check_branch
      %59 = sbr.rel (0) target = $region17
    $region16: #{tpu_custom_call.1} parent=1 // pred_region
      %61 = vsyncadd [#allocation9], 0
      %s62 = sshll.u32 %s3, 4
      %s63 = int_to_ptr.hbm [resolvable:$true] %s62
      %s64 = sshll.u32 [#allocation8], 4
      %s65 = int_to_ptr.vmem [resolvable:$true] %s64
      %70 = dma.hbm_to_vmem [thread:$0]  %s63, 512, %s65, [#allocation9], 128, 128, 8
    $region17: #{tpu_custom_call.1} parent=1 // pred_fallthru
      _
    // Predicated region
    $region18: #{tpu_custom_call.1} parent=1 // pred_check
      _
    $region19: #{tpu_custom_call.1} parent=1 // pred_check_branch
      %72 = sbr.rel (0) target = $region21
    $region20: #{tpu_custom_call.1} parent=1 // pred_region
      %74 = vsyncadd [#allocation9], 0
      %s75 = sshll.u32 %s4, 4
      %s76 = int_to_ptr.hbm [resolvable:$true] %s75
      %s77 = sshll.u32 [#allocation10], 4
      %s78 = int_to_ptr.vmem [resolvable:$true] %s77
      %83 = dma.hbm_to_vmem [thread:$0]  %s76, 512, %s78, [#allocation9], 128, 128, 8
    $region21: #{tpu_custom_call.1} parent=1 // pred_fallthru
      _
    // Predicated region
    $region22: #{tpu_custom_call.1} parent=1 // pred_check
      _
    $region23: #{tpu_custom_call.1} parent=1 // pred_check_branch
      %85 = sbr.rel (0) target = $region25
    $region24: #{tpu_custom_call.1} parent=1 // pred_region
      %87 = vsyncadd [#allocation12], 0
      %s88 = sshll.u32 %s5, 4
      %s89 = int_to_ptr.hbm [resolvable:$true] %s88
      %s90 = sshll.u32 [#allocation11], 4
      %s91 = int_to_ptr.vmem [resolvable:$true] %s90
      %96 = dma.hbm_to_vmem [thread:$0]  %s89, 512, %s91, [#allocation12], 128, 128, 8
    $region25: #{tpu_custom_call.1} parent=1 // pred_fallthru
      _
    // Predicated region
    $region26: #{tpu_custom_call.1} parent=1 // pred_check
      _
    $region27: #{tpu_custom_call.1} parent=1 // pred_check_branch
      %98 = sbr.rel (0) target = $region29
    $region28: #{tpu_custom_call.1} parent=1 // pred_region
      %100 = dma.done [#allocation3], 256
    $region29: #{tpu_custom_call.1} parent=1 // pred_fallthru
      _
    // Predicated region
    $region30: #{tpu_custom_call.1} parent=1 // pred_check
      _
    $region31: #{tpu_custom_call.1} parent=1 // pred_check_branch
      %102 = sbr.rel (0) target = $region33
    $region32: #{tpu_custom_call.1} parent=1 // pred_region
      %104 = dma.done [#allocation6], 256
    $region33: #{tpu_custom_call.1} parent=1 // pred_fallthru
      _
    // Predicated region
    $region34: #{tpu_custom_call.1} parent=1 // pred_check
      _
    $region35: #{tpu_custom_call.1} parent=1 // pred_check_branch
      %106 = sbr.rel (0) target = $region37
    $region36: #{tpu_custom_call.1} parent=1 // pred_region
      %108 = dma.done [#allocation6], 256
    $region37: #{tpu_custom_call.1} parent=1 // pred_fallthru
      _
    // Predicated region
    $region38: #{tpu_custom_call.1} parent=1 // pred_check
      _
    $region39: #{tpu_custom_call.1} parent=1 // pred_check_branch
      %110 = sbr.rel (0) target = $region41
    $region40: #{tpu_custom_call.1} parent=1 // pred_region
      %112 = dma.done [#allocation9], 512
    $region41: #{tpu_custom_call.1} parent=1 // pred_fallthru
      _
    // Predicated region
    $region42: #{tpu_custom_call.1} parent=1 // pred_check
      _
    $region43: #{tpu_custom_call.1} parent=1 // pred_check_branch
      %114 = sbr.rel (0) target = $region45
    $region44: #{tpu_custom_call.1} parent=1 // pred_region
      %116 = dma.done [#allocation9], 512
    $region45: #{tpu_custom_call.1} parent=1 // pred_fallthru
      _
    // Predicated region
    $region46: #{tpu_custom_call.1} parent=1 // pred_check
      _
    $region47: #{tpu_custom_call.1} parent=1 // pred_check_branch
      %118 = sbr.rel (0) target = $region49
    $region48: #{tpu_custom_call.1} parent=1 // pred_region
      %120 = dma.done [#allocation12], 512
    $region49: #{tpu_custom_call.1} parent=1 // pred_fallthru
      _
    %v121 = vld [vmem:[#allocation2] sm:$0xff]
    %v122 = vld [vmem:[#allocation2 + $0x8] sm:$0xff]
    %v123 = vld [vmem:[#allocation5] sm:$0xff]
    %v124 = vld [vmem:[#allocation5 + $0x8] sm:$0xff]
    %v125 = vld [vmem:[#allocation7] sm:$0xff]
    %v126 = vld [vmem:[#allocation7 + $0x8] sm:$0xff]
    %v127 = vld [vmem:[#allocation8] sm:$0xff]
    %v128 = vld [vmem:[#allocation8 + $0x8] sm:$0xff]
    %v129 = vld [vmem:[#allocation8 + $0x10] sm:$0xff]
    %v130 = vld [vmem:[#allocation8 + $0x18] sm:$0xff]
    %vm131 = vcmask 261120
    %v133 = vsel %vm131, %v121, 0
    %v136 = vsel %vm131, %v122, 0
    %v139 = vsel %vm131, %v127, 0
    %v142 = vsel %vm131, %v128, 0
    %v145 = vsel %vm131, %v129, 0
    %v148 = vsel %vm131, %v130, 0
    %150 = vmatpush.xpose.msra.mxu0 0.0
    %151 = vmatpush.xpose.msra.mxu0 0.0
    %152 = vmatpush.xpose.msra.mxu0 0.0
    %153 = vmatpush.xpose.msra.mxu0 0.0
    %154 = vmatpush.xpose.msra.mxu0 0.0
    %155 = vmatpush.xpose.msra.mxu0 0.0
    %156 = vmatpush.xpose.msra.mxu0 0.0
    %157 = vmatpush.xpose.msra.mxu0 0.0
    %158 = vmatpush.xpose.msra.mxu0 0.0
    %159 = vmatpush.xpose.msra.mxu0 0.0
    %160 = vmatpush.xpose.msra.mxu0 0.0
    %161 = vmatpush.xpose.msra.mxu0 0.0
    %162 = vmatpush.xpose.msra.mxu0 %v148
    %163 = vmatpush.xpose.msra.mxu0 %v145
    %164 = vmatpush.xpose.msra.mxu0 %v142
    %165 = vmatpush.xpose.msra.mxu0 %v139
    %166 = vmatmul.f32.gmra.mxu0 %v133
    %v167 = vpop.f32.mrf.mxu0
    %v168 = vadd.f32 0.0, %v167
    %169 = vmatmul.f32.gmra.mxu0 %v136
    %v170 = vpop.f32.mrf.mxu0
    %v171 = vadd.f32 0.0, %v170
    %172 = vdwg.mxu0
    %v173 = vld [vmem:[#allocation10] sm:$0xff]
    %v174 = vld [vmem:[#allocation10 + $0x8] sm:$0xff]
    %v175 = vld [vmem:[#allocation10 + $0x10] sm:$0xff]
    %v176 = vld [vmem:[#allocation10 + $0x18] sm:$0xff]
    %v178 = vsel %vm131, %v123, 0
    %v181 = vsel %vm131, %v124, 0
    %v184 = vsel %vm131, %v173, 0
    %v187 = vsel %vm131, %v174, 0
    %v190 = vsel %vm131, %v175, 0
    %v193 = vsel %vm131, %v176, 0
    %195 = vmatpush.xpose.msra.mxu0 0.0
    %196 = vmatpush.xpose.msra.mxu0 0.0
    %197 = vmatpush.xpose.msra.mxu0 0.0
    %198 = vmatpush.xpose.msra.mxu0 0.0
    %199 = vmatpush.xpose.msra.mxu0 0.0
    %200 = vmatpush.xpose.msra.mxu0 0.0
    %201 = vmatpush.xpose.msra.mxu0 0.0
    %202 = vmatpush.xpose.msra.mxu0 0.0
    %203 = vmatpush.xpose.msra.mxu0 0.0
    %204 = vmatpush.xpose.msra.mxu0 0.0
    %205 = vmatpush.xpose.msra.mxu0 0.0
    %206 = vmatpush.xpose.msra.mxu0 0.0
    %207 = vmatpush.xpose.msra.mxu0 %v193
    %208 = vmatpush.xpose.msra.mxu0 %v190
    %209 = vmatpush.xpose.msra.mxu0 %v187
    %210 = vmatpush.xpose.msra.mxu0 %v184
    %211 = vmatmul.f32.gmra.mxu0 %v178
    %v212 = vpop.f32.mrf.mxu0
    %v213 = vadd.f32 0.0, %v212
    %214 = vmatmul.f32.gmra.mxu0 %v181
    %v215 = vpop.f32.mrf.mxu0
    %v216 = vadd.f32 0.0, %v215
    %217 = vdwg.mxu0
    %v218 = vld [vmem:[#allocation11] sm:$0xff]
    %v219 = vld [vmem:[#allocation11 + $0x8] sm:$0xff]
    %v220 = vld [vmem:[#allocation11 + $0x10] sm:$0xff]
    %v221 = vld [vmem:[#allocation11 + $0x18] sm:$0xff]
    %v223 = vsel %vm131, %v125, 0
    %v226 = vsel %vm131, %v126, 0
    %v229 = vsel %vm131, %v218, 0
    %v232 = vsel %vm131, %v219, 0
    %v235 = vsel %vm131, %v220, 0
    %v238 = vsel %vm131, %v221, 0
    %240 = vmatpush.xpose.msra.mxu0 0.0
    %241 = vmatpush.xpose.msra.mxu0 0.0
    %242 = vmatpush.xpose.msra.mxu0 0.0
    %243 = vmatpush.xpose.msra.mxu0 0.0
    %244 = vmatpush.xpose.msra.mxu0 0.0
    %245 = vmatpush.xpose.msra.mxu0 0.0
    %246 = vmatpush.xpose.msra.mxu0 0.0
    %247 = vmatpush.xpose.msra.mxu0 0.0
    %248 = vmatpush.xpose.msra.mxu0 0.0
    %249 = vmatpush.xpose.msra.mxu0 0.0
    %250 = vmatpush.xpose.msra.mxu0 0.0
    %251 = vmatpush.xpose.msra.mxu0 0.0
    %252 = vmatpush.xpose.msra.mxu0 %v238
    %253 = vmatpush.xpose.msra.mxu0 %v235
    %254 = vmatpush.xpose.msra.mxu0 %v232
    %255 = vmatpush.xpose.msra.mxu0 %v229
    %256 = vmatmul.f32.gmra.mxu0 %v223
    %v257 = vpop.f32.mrf.mxu0
    %v258 = vadd.f32 0.0, %v257
    %259 = vmatmul.f32.gmra.mxu0 %v226
    %v260 = vpop.f32.mrf.mxu0
    %v261 = vadd.f32 0.0, %v260
    %262 = vdwg.mxu0
    %v263 = vmul.f32 %v168, 0.17677669
    %v264 = vmul.f32 %v171, 0.17677669
    %v266 = vsel %vm131, %v263, 0
    %v269 = vsel %vm131, %v213, 0
    %271 = vmatpush.xpose.msra.mxu0 0.0
    %272 = vmatpush.xpose.msra.mxu0 0.0
    %273 = vmatpush.xpose.msra.mxu0 0.0
    %274 = vmatpush.xpose.msra.mxu0 0.0
    %275 = vmatpush.xpose.msra.mxu0 0.0
    %276 = vmatpush.xpose.msra.mxu0 0.0
    %277 = vmatpush.xpose.msra.mxu0 0.0
    %278 = vmatpush.xpose.msra.mxu0 0.0
    %279 = vmatpush.xpose.msra.mxu0 0.0
    %280 = vmatpush.xpose.msra.mxu0 0.0
    %281 = vmatpush.xpose.msra.mxu0 0.0
    %282 = vmatpush.xpose.msra.mxu0 0.0
    %283 = vmatpush.xpose.msra.mxu0 0.0
    %284 = vmatpush.xpose.msra.mxu0 0.0
    %285 = vmatpush.xpose.msra.mxu0 0.0
    %286 = vmatpush.xpose.msra.mxu0 %v269
    %287 = vmatmul.f32.gmra.mxu0 %v266
    %v288 = vpop.f32.mrf.mxu0
    %v289 = vadd.f32 0.0, %v288
    %290 = vdwg.mxu0
    %v292 = vsel %vm131, %v264, 0
    %v295 = vsel %vm131, %v216, 0
    %297 = vmatpush.xpose.msra.mxu0 0.0
    %298 = vmatpush.xpose.msra.mxu0 0.0
    %299 = vmatpush.xpose.msra.mxu0 0.0
    %300 = vmatpush.xpose.msra.mxu0 0.0
    %301 = vmatpush.xpose.msra.mxu0 0.0
    %302 = vmatpush.xpose.msra.mxu0 0.0
    %303 = vmatpush.xpose.msra.mxu0 0.0
    %304 = vmatpush.xpose.msra.mxu0 0.0
    %305 = vmatpush.xpose.msra.mxu0 0.0
    %306 = vmatpush.xpose.msra.mxu0 0.0
    %307 = vmatpush.xpose.msra.mxu0 0.0
    %308 = vmatpush.xpose.msra.mxu0 0.0
    %309 = vmatpush.xpose.msra.mxu0 0.0
    %310 = vmatpush.xpose.msra.mxu0 0.0
    %311 = vmatpush.xpose.msra.mxu0 0.0
    %312 = vmatpush.xpose.msra.mxu0 %v295
    %313 = vmatmul.f32.gmra.mxu0 %v292
    %v314 = vpop.f32.mrf.mxu0
    %v315 = vadd.f32 0.0, %v314
    %316 = vdwg.mxu0
    %vm317 = vcmask 64512
    %v318 = vsel %vm317, %v289, -inf
    %319 = vmax.xlane.f32.xlu0 %v318
    %v320 = vpop.xlane.xlu0 %319
    %v321 = vsel %vm317, %v315, -inf
    %322 = vmax.xlane.f32.xlu0 %v321
    %v323 = vpop.xlane.xlu0 %322
    %v324 = vsub.f32 %v289, %v320
    %v325 = vsub.f32 %v315, %v323
    %v326 = vmul.f32 %v324, 1.442695
    %v327 = vpow.pop %v326
    %v328 = vmul.f32 %v325, 1.442695
    %v329 = vpow.pop %v328
    %v330 = vsel %vm317, %v327, 0.0
    %331 = vadd.xlane.f32.xlu0 %v330
    %v332 = vpop.xlane.xlu0 %331
    %v333 = vsel %vm317, %v329, 0.0
    %334 = vadd.xlane.f32.xlu0 %v333
    %v335 = vpop.xlane.xlu0 %334
    %v336 = vrcp.pop %v332
    %v337 = vrcp.pop %v335
    %v338 = vmul.f32 %v332, %v336
    %v339 = vmul.f32 %v335, %v337
    %v340 = vsub.f32 2.0, %v338
    %v341 = vsub.f32 2.0, %v339
    %v342 = vmul.f32 %v336, %v340
    %v343 = vmul.f32 %v337, %v341
    %v344 = vmul.f32 %v327, %v342
    %v345 = vmul.f32 %v329, %v343
    %v347 = vsel %vm317, %v344, 0
    %349 = vmatpush.msra.mxu0 0.0
    %350 = vmatpush.msra.mxu0 0.0
    %351 = vmatpush.msra.mxu0 0.0
    %352 = vmatpush.msra.mxu0 0.0
    %353 = vmatpush.msra.mxu0 0.0
    %354 = vmatpush.msra.mxu0 0.0
    %355 = vmatpush.msra.mxu0 0.0
    %356 = vmatpush.msra.mxu0 0.0
    %357 = vmatpush.msra.mxu0 0.0
    %358 = vmatpush.msra.mxu0 0.0
    %359 = vmatpush.msra.mxu0 0.0
    %360 = vmatpush.msra.mxu0 0.0
    %361 = vmatpush.msra.mxu0 0.0
    %362 = vmatpush.msra.mxu0 0.0
    %363 = vmatpush.msra.mxu0 0.0
    %364 = vmatpush.msra.mxu0 %v258
    %365 = vmatmul.f32.gmra.mxu0 %v347
    %v366 = vpop.f32.mrf.mxu0
    %v367 = vadd.f32 0.0, %v366
    %368 = vdwg.mxu0
    %v370 = vsel %vm317, %v345, 0
    %372 = vmatpush.msra.mxu0 0.0
    %373 = vmatpush.msra.mxu0 0.0
    %374 = vmatpush.msra.mxu0 0.0
    %375 = vmatpush.msra.mxu0 0.0
    %376 = vmatpush.msra.mxu0 0.0
    %377 = vmatpush.msra.mxu0 0.0
    %378 = vmatpush.msra.mxu0 0.0
    %379 = vmatpush.msra.mxu0 0.0
    %380 = vmatpush.msra.mxu0 0.0
    %381 = vmatpush.msra.mxu0 0.0
    %382 = vmatpush.msra.mxu0 0.0
    %383 = vmatpush.msra.mxu0 0.0
    %384 = vmatpush.msra.mxu0 0.0
    %385 = vmatpush.msra.mxu0 0.0
    %386 = vmatpush.msra.mxu0 0.0
    %387 = vmatpush.msra.mxu0 %v261
    %388 = vmatmul.f32.gmra.mxu0 %v370
    %v389 = vpop.f32.mrf.mxu0
    %v390 = vadd.f32 0.0, %v389
    %391 = vdwg.mxu0
    %392 = vst.msk [vmem:[#allocation13] sm:$0xff] %vm131, %v367
    %393 = vst.msk [vmem:[#allocation13 + $0x8] sm:$0xff] %vm131, %v390
    %394 = vst.msk [vmem:[#allocation14] sm:$0xff] %vm317, %v344
    %395 = vst.msk [vmem:[#allocation14 + $0x8] sm:$0xff] %vm317, %v345
    // Predicated region
    $region50: #{tpu_custom_call.1} parent=1 // pred_check
      _
    $region51: #{tpu_custom_call.1} parent=1 // pred_check_branch
      %397 = sbr.rel (0) target = $region53
    $region52: #{tpu_custom_call.1} parent=1 // pred_region
      %399 = vsyncadd [#allocation4], 0
      %s400 = sshll.u32 [#allocation13], 4
      %s401 = int_to_ptr.vmem [resolvable:$true] %s400
      %s402 = sshll.u32 %s6, 4
      %s403 = int_to_ptr.hbm [resolvable:$true] %s402
      %408 = dma.vmem_to_hbm [thread:$0]  %s401, 256, %s403, [#allocation4], 128, 128, 8
    $region53: #{tpu_custom_call.1} parent=1 // pred_fallthru
      _
    // Predicated region
    $region54: #{tpu_custom_call.1} parent=1 // pred_check
      _
    $region55: #{tpu_custom_call.1} parent=1 // pred_check_branch
      %410 = sbr.rel (0) target = $region57
    $region56: #{tpu_custom_call.1} parent=1 // pred_region
      %412 = vsyncadd [#allocation15], 0
      %s413 = sshll.u32 [#allocation14], 4
      %s414 = int_to_ptr.vmem [resolvable:$true] %s413
      %s415 = sshll.u32 %s7, 4
      %s416 = int_to_ptr.hbm [resolvable:$true] %s415
      %421 = dma.vmem_to_hbm [thread:$0]  %s414, 256, %s416, [#allocation15], 128, 128, 8
    $region57: #{tpu_custom_call.1} parent=1 // pred_fallthru
      _
    // Predicated region
    $region58: #{tpu_custom_call.1} parent=1 // pred_check
      _
    $region59: #{tpu_custom_call.1} parent=1 // pred_check_branch
      %423 = sbr.rel (0) target = $region61
    $region60: #{tpu_custom_call.1} parent=1 // pred_region
      %425 = dma.done [#allocation4], 256
    $region61: #{tpu_custom_call.1} parent=1 // pred_fallthru
      _
    // Predicated region
    $region62: #{tpu_custom_call.1} parent=1 // pred_check
      _
    $region63: #{tpu_custom_call.1} parent=1 // pred_check_branch
      %427 = sbr.rel (0) target = $region65
    $region64: #{tpu_custom_call.1} parent=1 // pred_region
      %429 = dma.done [#allocation15], 256
    $region65: #{tpu_custom_call.1} parent=1 // pred_fallthru
      _
    %430 = vsyncpa [#allocation3], 1
    %431 = vsyncpa [#allocation6], 1
    %432 = vsyncpa [#allocation9], 1
    %433 = vsyncpa [#allocation12], 1
    %434 = vsyncpa [#allocation4], 1
    %435 = vsyncpa [#allocation15], 1

</llo_original>
